<compile_context>
chip_gen: v6e
topology: v6e:2x2x1
jax: 0.10.0
libtpu: 0.0.40
codegen_flags: <defaults>
</compile_context>

<pallas_src>
import math

import jax
import jax.numpy as jnp
import numpy as np
from jax.experimental import pallas as pl
from jax.experimental.pallas import tpu as pltpu


# ----------------------------------------------------------------------------
# Pallas kernel: Nb independent (Co, Ci) x (Ci, TS) matmuls + bias per step
# ----------------------------------------------------------------------------
def d4_1x1_kernel(w_ref, b_ref, x_ref, o_ref):
    # w_ref: (Co, Ci)       shared weight (constant index_map -> fetched once)
    # b_ref: (Co, 1)        f32 bias (zeros if the module had no bias)
    # x_ref: (Nb, Ci, TS)   Nb batch rows x one lane-dense spatial tile
    # o_ref: (Nb, Co, TS)
    w = w_ref[...]
    b = b_ref[...]
    for i in range(x_ref.shape[0]):            # static unroll, Nb <= 8
        acc = jnp.dot(w, x_ref[i], preferred_element_type=jnp.float32)  # (Co, TS) f32
        o_ref[i] = (acc + b).astype(o_ref.dtype)


# ----------------------------------------------------------------------------
# Tile planning (VMEM-, dtype- and generation-aware)
# ----------------------------------------------------------------------------
_LANE = 128
_IO_VMEM_BUDGET = 24 * 1024 * 1024   # double-buffered x+out blocks (<= v7x 32 MiB scoped)
_MAX_SPATIAL_TILE = 512 * 1024       # lanes per step (amortizes ~0.35us step overhead)
_MAX_BATCH_BLOCK = 8                 # cap on the in-kernel unrolled batch loop


def _cdiv(a, b):
    return -(-a // b)


def _round_up(x, m):
    return _cdiv(x, m) * m


def _sublane_pad(c, itemsize):
    # sublane packing: f32 -> 8, bf16 -> 16, int8/fp8 -> 32 rows per vreg tile
    sub = max(8, 8 * (4 // max(itemsize, 1)))
    return max(sub, _round_up(c, sub))


def _plan_tiles(N, S, Ci, Co, in_itemsize, out_itemsize):
    """Pick (batch block Nb, spatial tile TS) and report the I/O VMEM bytes used."""
    ci_p = _sublane_pad(Ci, in_itemsize)
    co_p = _sublane_pad(Co, out_itemsize)
    bytes_per_lane = 2 * (ci_p * in_itemsize + co_p * out_itemsize)  # double buffered
    budget_lanes = max(_LANE, _IO_VMEM_BUDGET // bytes_per_lane)

    s_pad = _round_up(S, _LANE)
    ts = min((budget_lanes // _LANE) * _LANE, _MAX_SPATIAL_TILE, s_pad)
    ts = max(ts, _LANE)

    nb = 1
    if ts >= s_pad:
        # Whole spatial axis fits in one tile: block several batch rows per
        # step so each grid step still moves a few MiB.
        ts = s_pad
        nb = max(1, min(N, _MAX_BATCH_BLOCK, budget_lanes // s_pad))

    # v7x has 2 TensorCores: make sure the (parallel) grid has >= 2 steps.
    if _cdiv(N, nb) * _cdiv(S, ts) < 2:
        if nb > 1:
            nb = _cdiv(N, 2)                 # -> >= 2 batch blocks
        elif S > _LANE:
            ts = max(_LANE, _round_up(_cdiv(S, 2), _LANE))

    io_bytes = 2 * nb * ts * (ci_p * in_itemsize + co_p * out_itemsize)
    return nb, ts, io_bytes


# ----------------------------------------------------------------------------
# Wrapper
# ----------------------------------------------------------------------------
def d4_1x1_forward(x_nchw, weight, bias, *, compute_dtype=None):
    """Forward pass matching D_4_1x1_.forward.

    x_nchw : (N, in_channels*8, H, W)
    weight : (out_channels, in_channels, 1, 1, 1)   nn.Conv3d kernel-1 weight
    bias   : (out_channels,) or None
    """
    N, C, H, W = x_nchw.shape
    Co, Ci = weight.shape[0], weight.shape[1]
    assert C == Ci * 8, "input channel dim must equal in_channels * 8"

    S = 8 * H * W                       # flattened (group=8, H, W) lane axis

    # Contiguous (free) reshapes -- no transpose / pad passes over HBM.
    x_r = x_nchw.reshape(N, Ci, S)
    w2 = weight.reshape(Co, Ci)
    if compute_dtype is not None:
        x_r = x_r.astype(compute_dtype)
        w2 = w2.astype(compute_dtype)
    out_dtype = x_r.dtype               # output dtype follows compute dtype

    if bias is None:
        b2 = jnp.zeros((Co, 1), jnp.float32)
    else:
        b2 = bias.reshape(Co, 1).astype(jnp.float32)

    in_it = jnp.dtype(x_r.dtype).itemsize
    out_it = jnp.dtype(out_dtype).itemsize
    nb, ts, io_bytes = _plan_tiles(N, S, Ci, Co, in_it, out_it)

    # Scoped-VMEM limit sized to the actual working set (blocks + weight),
    # clamped to [32 MiB, 48 MiB] -- safe on v5e/v6e (128 MiB) and v7x (64 MiB).
    weight_bytes = _sublane_pad(Co, in_it) * _round_up(Ci, _LANE) * in_it
    vmem_limit = int(min(max(io_bytes + weight_bytes + (8 << 20), 32 << 20), 48 << 20))

    # Advisory cost: this is a pure-bandwidth op (~1 FLOP/byte).
    cost = pl.CostEstimate(
        flops=2 * N * S * Ci * Co,
        transcendentals=0,
        bytes_accessed=N * S * (Ci * in_it + Co * out_it) + Co * Ci * in_it + Co * 4,
    )

    out = pl.pallas_call(
        d4_1x1_kernel,
        out_shape=jax.ShapeDtypeStruct((N, Co, S), out_dtype),
        grid_spec=pltpu.PrefetchScalarGridSpec(
            num_scalar_prefetch=0,
            grid=(_cdiv(N, nb), _cdiv(S, ts)),
            in_specs=[
                pl.BlockSpec((Co, Ci), lambda n, s: (0, 0)),
                pl.BlockSpec((Co, 1), lambda n, s: (0, 0)),
                pl.BlockSpec((nb, Ci, ts), lambda n, s: (n, 0, s)),
            ],
            out_specs=pl.BlockSpec((nb, Co, ts), lambda n, s: (n, 0, s)),
        ),
        compiler_params=pltpu.CompilerParams(
            dimension_semantics=("parallel", "parallel"),
            vmem_limit_bytes=vmem_limit),
        cost_estimate=cost,
    )(w2, b2, x_r)

    # (N, Co, 8*H*W) and (N, Co*8, H, W) share the same contiguous layout.
    return out.reshape(N, Co * 8, H, W)


# ----------------------------------------------------------------------------
# Pure-JAX reference (direct transcription of the torch forward) for checking
# ----------------------------------------------------------------------------
def d4_1x1_reference(x_nchw, weight, bias):
    N, C, H, W = x_nchw.shape
    Co, Ci = weight.shape[0], weight.shape[1]
    xv = x_nchw.reshape(N, Ci, 8, H, W).astype(jnp.float32)
    out = jnp.einsum("oc,ncghw->noghw",
                     weight.reshape(Co, Ci).astype(jnp.float32), xv)
    if bias is not None:
        out = out + bias.reshape(1, Co, 1, 1, 1)
    return out.reshape(N, Co * 8, H, W)


if __name__ == "__main__":
    # Small shapes consistent with the module: in_channels=4, out_channels=4,
    # so the NCHW input has C = in_channels*8 = 32 channels.
    in_channels, out_channels = 4, 4
    N, H, W = 2, 16, 16

    key = jax.random.PRNGKey(0)
    kx, kw, kb = jax.random.split(key, 3)

    x = jax.random.normal(kx, (N, in_channels * 8, H, W), jnp.float32)
    bound = 1.0 / math.sqrt(in_channels)            # nn.Conv3d default init scale
    weight = jax.random.uniform(kw, (out_channels, in_channels, 1, 1, 1),
                                jnp.float32, -bound, bound)
    bias = jax.random.uniform(kb, (out_channels,), jnp.float32, -bound, bound)

    ref = jax.block_until_ready(d4_1x1_reference(x, weight, bias))

    # Config 1: f32 operands, f32 accumulation, f32 output -- tight tolerance.
    out_f32 = jax.block_until_ready(d4_1x1_forward(x, weight, bias))
    np.testing.assert_allclose(np.asarray(out_f32), np.asarray(ref),
                               rtol=1e-4, atol=1e-4)

    # Config 2: bf16 operands AND bf16 output (minimal HBM traffic), f32 accumulation.
    out_bf16 = jax.block_until_ready(
        d4_1x1_forward(x, weight, bias, compute_dtype=jnp.bfloat16))
    np.testing.assert_allclose(np.asarray(out_bf16.astype(jnp.float32)),
                               np.asarray(ref), rtol=2e-2, atol=2e-2)

    print("KERNEL_OK")
</pallas_src>

<mosaic_0001>
module attributes {stable_mosaic.version = 11 : i64} {
  func.func @d4_1x1_kernel(%arg0: i32, %arg1: i32, %arg2: memref<4x4xf32, #tpu.memory_space<vmem>>, %arg3: memref<4x1xf32, #tpu.memory_space<vmem>>, %arg4: memref<1x4x2048xf32, #tpu.memory_space<vmem>>, %arg5: memref<1x4x2048xf32, #tpu.memory_space<vmem>>) attributes {dimension_semantics = [#tpu.dimension_semantics<parallel>, #tpu.dimension_semantics<parallel>], iteration_bounds = array<i64: 2, 1>, scalar_prefetch = 0 : i64, scratch_operands = 0 : i64, tpu.core_type = #tpu.core_type<tc>, window_params = [{pipeline_mode = #tpu.pipeline_mode<synchronous>, transform_indices = @transform_0, window_bounds = array<i64: 4, 4>}, {pipeline_mode = #tpu.pipeline_mode<synchronous>, transform_indices = @transform_1, window_bounds = array<i64: 4, 1>}, {transform_indices = @transform_2, window_bounds = array<i64: 1, 4, 2048>}, {transform_indices = @transform_3, window_bounds = array<i64: 1, 4, 2048>}]} {
    %c0 = arith.constant 0 : index
    %c0_0 = arith.constant 0 : index
    %0 = vector.load %arg2[%c0, %c0_0] : memref<4x4xf32, #tpu.memory_space<vmem>>, vector<4x4xf32>
    %c0_1 = arith.constant 0 : index
    %c0_2 = arith.constant 0 : index
    %1 = vector.load %arg3[%c0_1, %c0_2] : memref<4x1xf32, #tpu.memory_space<vmem>>, vector<4x1xf32>
    %c0_3 = arith.constant 0 : index
    %c0_4 = arith.constant 0 : index
    %c0_5 = arith.constant 0 : index
    %2 = vector.load %arg4[%c0_3, %c0_4, %c0_5] : memref<1x4x2048xf32, #tpu.memory_space<vmem>>, vector<1x4x2048xf32>
    %3 = vector.shape_cast %2 : vector<1x4x2048xf32> to vector<4x2048xf32>
    %cst = arith.constant dense<0.000000e+00> : vector<4x2048xf32>
    %4 = tpu.matmul %0, %3, %cst {dimension_numbers = #tpu.dot_dimension_numbers<[1], [0], [0], [1], [0, 0, 1, 1], [], []>} : vector<4x4xf32>, vector<4x2048xf32>, vector<4x2048xf32> -> vector<4x2048xf32>
    %5 = vector.broadcast %1 : vector<4x1xf32> to vector<4x2048xf32>
    %6 = arith.addf %4, %5 : vector<4x2048xf32>
    %c0_6 = arith.constant 0 : index
    %c0_7 = arith.constant 0 : index
    %c0_8 = arith.constant 0 : index
    %7 = vector.load %arg5[%c0_6, %c0_7, %c0_8] : memref<1x4x2048xf32, #tpu.memory_space<vmem>>, vector<1x4x2048xf32>
    %8 = vector.shape_cast %7 : vector<1x4x2048xf32> to vector<4x2048xf32>
    %9 = vector.shape_cast %6 : vector<4x2048xf32> to vector<1x4x2048xf32>
    tpu.vector_store %arg5[%c0_6, %c0_7, %c0_8], %9 {strides = array<i32>} : memref<1x4x2048xf32, #tpu.memory_space<vmem>>, vector<1x4x2048xf32>,
    return
  }
  func.func @transform_0(%arg0: i32, %arg1: i32) -> (i32, i32) {
    %c0_i32 = arith.constant 0 : i32
    %c0_i32_0 = arith.constant 0 : i32
    %c0_i32_1 = arith.constant 0 : i32
    return %c0_i32, %c0_i32_0 : i32, i32
  }
  func.func @transform_1(%arg0: i32, %arg1: i32) -> (i32, i32) {
    %c0_i32 = arith.constant 0 : i32
    %c0_i32_0 = arith.constant 0 : i32
    %c0_i32_1 = arith.constant 0 : i32
    return %c0_i32, %c0_i32_0 : i32, i32
  }
  func.func @transform_2(%arg0: i32, %arg1: i32) -> (i32, i32, i32) {
    %c0_i32 = arith.constant 0 : i32
    %c0_i32_0 = arith.constant 0 : i32
    return %arg0, %c0_i32, %arg1 : i32, i32, i32
  }
  func.func @transform_3(%arg0: i32, %arg1: i32) -> (i32, i32, i32) {
    %c0_i32 = arith.constant 0 : i32
    %c0_i32_0 = arith.constant 0 : i32
    return %arg0, %c0_i32, %arg1 : i32, i32, i32
  }
}

</mosaic_0001>

<llo_original>
// kernel: tpu_custom_call.1
$region0: #{tpu_custom_call.1}
  #allocation0 [shape = 'u32[]', space=smem, size = 0x4, offset = 0x4, fixed_abs, tag = 'smem constant byte address 0x4 - core index']
  #allocation1 [shape = 'u32[144,128]{1,0:T(1,128)}', space=vmem, size = 0x12000, scoped, tag = 'internal scratch']
  %s0 = inlined_call_operand.vmem [shape: f32[4,4], index: 0, kind: input, shape index: {}]
  %s1 = inlined_call_operand.vmem [shape: f32[4,1], index: 1, kind: input, shape index: {}]
  %s2 = inlined_call_operand.hbm [shape: f32[2,4,2048], index: 2, kind: input, shape index: {}]
  %s3 = inlined_call_operand.hbm [shape: f32[2,4,2048], index: 3, kind: output, shape index: {}]
  %s4 = sld [smem:[#allocation0]]
  $region49: #{tpu_custom_call.1} parent=0
    _
  %s6 = ssub.s32 1, %s4
  %s7 = scalar_select 0, %s6, %s4
  $region1: #{tpu_custom_call.1} parent=0
    #allocation2 [shape = 'u8[65536]{0}', space=vmem, size = 0x10000, scoped, tag = 'input window, operand 2']
    #allocation3 [shape = 's32[2]{0}', space=sflag, size = 0x8, scoped, tag = 'scoped memory for tpu_custom_call.1']
    #allocation4 [shape = 's32[2]{0}', space=sflag, size = 0x8, scoped, tag = 'scoped memory for tpu_custom_call.1']
    #allocation5 [shape = 'u8[65536]{0}', space=vmem, size = 0x10000, scoped, tag = 'output window, operand 0']
    %8 = vsyncpa [#allocation3], 0
    %s9 = scalar_lea.sflag [#allocation3], 1
    %10 = vsyncpa %s9, 0
    %11 = vsyncpa [#allocation4], 0
    %s12 = scalar_lea.sflag [#allocation4], 1
    %13 = vsyncpa %s12, 0
    loop: start=0, step=1, limit=4
    $region2: #{tpu_custom_call.1} parent=1 // loop_pre_header
      _
    $region3: #{tpu_custom_call.1} parent=1 // loop_header
      %s15 = sphi 0, %s19
      %p16 = scmp.ge.s32.totalorder %s15, 4
      %s22 = sphi 0, %s34
      %s23 = sphi 0, %s30
      %s24 = sphi 0, %s22
      %s25 = sphi 0, %s23
      %s26 = sphi 0, %s24
      %s27 = sphi 0, %s25
      %s35 = sphi 0, %s35
      %s37 = sphi 0, %s35
      %s38 = sphi 0, %s37
      %s52 = sphi 0, %s38
      %s56 = sphi 0, %s56
      %s58 = sphi 0, %s56
      %s59 = sphi 0, %s58
      %s73 = sphi 0, %s59
      %s81 = sphi 0, %s83
      %s84 = sphi 0, %s81
      %s85 = sphi 0, %s84
      %s101 = sphi 0, %s85
      %s109 = sphi 0, %s111
      %s112 = sphi 0, %s109
      %s113 = sphi 0, %s112
      %s129 = sphi 0, %s113
    $region4: #{tpu_custom_call.1} parent=1 // loop_header_branch
      %18 = sbr.rel (%p16) target = $region8
    $region5: #{tpu_custom_call.1} parent=1 // loop_body
      %s20 = ssub.s32 %s15, 1
      %s21 = ssub.s32 %s15, 2
      %s28 = sadd.s32 1, %s23
      %p29 = scmp.ge.s32.totalorder %s28, 1
      %s30 = scalar_select %p29, 0, %s28
      %s31 = sadd.s32 1, %s22
      %s32 = scalar_select %p29, %s31, %s22
      %p33 = scmp.ge.s32.totalorder %s32, 2
      %s34 = scalar_select %p33, 0, %s32
      %s36 = sadd.s32 %s35, 1
      %p39 = scmp.eq.s32.totalorder %s15, 1
      %p40 = scmp.ne.s32.totalorder %s35, %s37
      %p41 = scmp.eq.s32.totalorder %s15, 0
      %p42 = por %p40, %p41
      %p43 = scmp.ne.s32.totalorder %s35, %s37
      %p44 = scmp.eq.s32.totalorder %s20, 1
      %p45 = por %p43, %p44
      %p46 = scmp.ne.s32.totalorder %s37, %s38
      %p47 = scmp.eq.s32.totalorder %s20, 0
      %p48 = por %p46, %p47
      %p49 = scmp.ne.s32.totalorder %s37, %s38
      %p50 = scmp.eq.s32.totalorder %s21, 1
      %p51 = por %p49, %p50
      %p53 = scmp.ne.s32.totalorder %s38, %s52
      %p54 = scmp.eq.s32.totalorder %s21, 0
      %p55 = por %p53, %p54
      %s57 = sadd.s32 %s56, 1
      %p60 = scmp.eq.s32.totalorder %s15, 1
      %p61 = scmp.ne.s32.totalorder %s56, %s58
      %p62 = scmp.eq.s32.totalorder %s15, 0
      %p63 = por %p61, %p62
      %p64 = scmp.ne.s32.totalorder %s56, %s58
      %p65 = scmp.eq.s32.totalorder %s20, 1
      %p66 = por %p64, %p65
      %p67 = scmp.ne.s32.totalorder %s58, %s59
      %p68 = scmp.eq.s32.totalorder %s20, 0
      %p69 = por %p67, %p68
      %p70 = scmp.ne.s32.totalorder %s58, %s59
      %p71 = scmp.eq.s32.totalorder %s21, 1
      %p72 = por %p70, %p71
      %p74 = scmp.ne.s32.totalorder %s59, %s73
      %p75 = scmp.eq.s32.totalorder %s21, 0
      %p76 = por %p74, %p75
      %s77 = ssub.s32 %s22, %s34
      %s78 = ssub.s32 %s23, %s30
      %s79 = sor.u32 %s77, %s78
      %p80 = scmp.eq.s32.totalorder %s79, 0
      %s82 = sadd.s32 %s81, 1
      %s83 = scalar_select %p80, %s81, %s82
      %p86 = pneg %p80
      %p87 = scmp.eq.s32.totalorder %s15, 1
      %p88 = por %p86, %p87
      %p89 = scmp.ne.s32.totalorder %s81, %s84
      %p90 = scmp.eq.s32.totalorder %s15, 0
      %p91 = por %p89, %p90
      %p92 = scmp.ne.s32.totalorder %s81, %s84
      %p93 = scmp.eq.s32.totalorder %s20, 1
      %p94 = por %p92, %p93
      %p95 = scmp.ne.s32.totalorder %s84, %s85
      %p96 = scmp.eq.s32.totalorder %s20, 0
      %p97 = por %p95, %p96
      %p98 = scmp.ne.s32.totalorder %s84, %s85
      %p99 = scmp.eq.s32.totalorder %s21, 1
      %p100 = por %p98, %p99
      %p102 = scmp.ne.s32.totalorder %s85, %s101
      %p103 = scmp.eq.s32.totalorder %s21, 0
      %p104 = por %p102, %p103
      %s105 = ssub.s32 %s22, %s34
      %s106 = ssub.s32 %s23, %s30
      %s107 = sor.u32 %s105, %s106
      %p108 = scmp.eq.s32.totalorder %s107, 0
      %s110 = sadd.s32 %s109, 1
      %s111 = scalar_select %p108, %s109, %s110
      %p114 = pneg %p108
      %p115 = scmp.eq.s32.totalorder %s15, 1
      %p116 = por %p114, %p115
      %p117 = scmp.ne.s32.totalorder %s109, %s112
      %p118 = scmp.eq.s32.totalorder %s15, 0
      %p119 = por %p117, %p118
      %p120 = scmp.ne.s32.totalorder %s109, %s112
      %p121 = scmp.eq.s32.totalorder %s20, 1
      %p122 = por %p120, %p121
      %p123 = scmp.ne.s32.totalorder %s112, %s113
      %p124 = scmp.eq.s32.totalorder %s20, 0
      %p125 = por %p123, %p124
      %p126 = scmp.ne.s32.totalorder %s112, %s113
      %p127 = scmp.eq.s32.totalorder %s21, 1
      %p128 = por %p126, %p127
      %p130 = scmp.ne.s32.totalorder %s113, %s129
      %p131 = scmp.eq.s32.totalorder %s21, 0
      %p132 = por %p130, %p131
      %p133 = scmp.le.s32.totalorder 1, %s15
      %p134 = scmp.lt.s32.totalorder %s15, 3
      %p135 = pnand %p133, %p134
      %p136 = pneg %p135
      // Predicated region
      $region9: #{tpu_custom_call.1} parent=5 // pred_check
        _
      $region10: #{tpu_custom_call.1} parent=5 // pred_check_branch
        %138 = sbr.rel (%p135) target = $region12
      $region11: #{tpu_custom_call.1} parent=5 // pred_region
        %s139 = ssub.s32 %s15, 1
        // Predicated region
        $region13: #{tpu_custom_call.1} parent=11 // pred_check
          %p140 = pneg %p48
        $region14: #{tpu_custom_call.1} parent=11 // pred_check_branch
          %142 = sbr.rel (%p140) target = $region16
        $region15: #{tpu_custom_call.1} parent=11 // pred_region
          _
        $region16: #{tpu_custom_call.1} parent=11 // pred_fallthru
          _
        // Predicated region
        $region17: #{tpu_custom_call.1} parent=11 // pred_check
          %p143 = pneg %p69
        $region18: #{tpu_custom_call.1} parent=11 // pred_check_branch
          %145 = sbr.rel (%p143) target = $region20
        $region19: #{tpu_custom_call.1} parent=11 // pred_region
          _
        $region20: #{tpu_custom_call.1} parent=11 // pred_fallthru
          _
      $region12: #{tpu_custom_call.1} parent=5 // pred_fallthru
        _
      %p146 = scmp.lt.s32.totalorder %s15, 2
      // Predicated region
      $region21: #{tpu_custom_call.1} parent=5 // pred_check
        %p147 = pneg %p146
      $region22: #{tpu_custom_call.1} parent=5 // pred_check_branch
        %149 = sbr.rel (%p147) target = $region24
      $region23: #{tpu_custom_call.1} parent=5 // pred_region
        // Predicated region
        $region25: #{tpu_custom_call.1} parent=23 // pred_check
          %p150 = pneg %p91
        $region26: #{tpu_custom_call.1} parent=23 // pred_check_branch
          %152 = sbr.rel (%p150) target = $region28
        $region27: #{tpu_custom_call.1} parent=23 // pred_region
          %s153 = sand.u32 %s81, 1
          %s154 = scalar_lea.sflag [#allocation3], %s153
          %s155 = sand.u32 %s81, 1
          %s156 = smul.addr %s155, 64
          %s157 = scalar_lea.vmem [#allocation2], %s156
          %s158 = smul.u32 16, %s23
          %s160 = ssub.s32 1024, 1024
          %161 = vsyncadd %s154, %s160
          %s162 = smul.addr %s22, 16
          %s163 = sadd.s32 %s158, %s162
          %s164 = smul.addr %s163, 64
          %s165 = scalar_lea.hbm %s2, %s164
          %s167 = sshll.u32 %s157, 4
          %s168 = int_to_ptr.vmem [resolvable:$true] %s167
          %170 = dma.hbm_to_vmem [thread:$0]  %s165, 1024, %s168, %s154
        $region28: #{tpu_custom_call.1} parent=23 // pred_fallthru
          _
      $region24: #{tpu_custom_call.1} parent=5 // pred_fallthru
        _
      %p171 = scmp.le.s32.totalorder 1, %s15
      %p172 = scmp.lt.s32.totalorder %s15, 3
      %p173 = pnand %p171, %p172
      %p174 = pneg %p173
      // Predicated region
      $region29: #{tpu_custom_call.1} parent=5 // pred_check
        _
      $region30: #{tpu_custom_call.1} parent=5 // pred_check_branch
        %176 = sbr.rel (%p173) target = $region32
      $region31: #{tpu_custom_call.1} parent=5 // pred_region
        %s177 = ssub.s32 %s15, 1
        %s178 = sand.u32 %s84, 1
        %s179 = scalar_lea.sflag [#allocation3], %s178
        %s180 = sand.u32 %s84, 1
        %s181 = smul.addr %s180, 64
        %s182 = scalar_lea.vmem [#allocation2], %s181
        // Predicated region
        $region33: #{tpu_custom_call.1} parent=31 // pred_check
          %p183 = pneg %p97
        $region34: #{tpu_custom_call.1} parent=31 // pred_check_branch
          %185 = sbr.rel (%p183) target = $region36
        $region35: #{tpu_custom_call.1} parent=31 // pred_region
          %186 = dma.done %s179, 1024
        $region36: #{tpu_custom_call.1} parent=31 // pred_fallthru
          _
        %p187 = pneg %p48
        %p188 = pneg %p45
        %p189 = pneg %p69
        %p190 = pneg %p66
        %s191 = sand.u32 %s84, 1
        %s192 = scalar_lea.sflag [#allocation3], %s191
        %s193 = sand.u32 %s84, 1
        %s194 = smul.addr %s193, 64
        %s195 = scalar_lea.vmem [#allocation2], %s194
        %p196 = pneg %p97
        %p197 = pneg %p94
        %p198 = pneg %p125
        %p199 = pneg %p122
        %s200 = sand.u32 %s112, 1
        %s201 = scalar_lea.sflag [#allocation4], %s200
        %s202 = sand.u32 %s112, 1
        %s203 = smul.addr %s202, 64
        %s204 = scalar_lea.vmem [#allocation5], %s203
        %s205 = smul.u32 16, %s25
        %s206 = smul.u32 16, %s25
        %v207 = vld [vmem:[%s0] sm:$0xf]
        %v208 = vld [vmem:[%s1] sm:$0xf]
        %v209 = vld [vmem:[%s182] sm:$0xff]
        %v210 = vld [vmem:[%s182 + $0x8] sm:$0xff]
        %v211 = vld [vmem:[%s182 + $0x10] sm:$0xff]
        %v212 = vld [vmem:[%s182 + $0x18] sm:$0xff]
        %v213 = vld [vmem:[%s182 + $0x20] sm:$0xff]
        %v214 = vld [vmem:[%s182 + $0x28] sm:$0xff]
        %v215 = vld [vmem:[%s182 + $0x30] sm:$0xff]
        %v216 = vld [vmem:[%s182 + $0x38] sm:$0xff]
        %218 = vset.pattern.permute.xlu0 0
        %219 = vperm.xlu0 %218, %v208
        %v220 = vpop.permute.xlu0 %219
        %v230 = vcombine.high %v209, %v209
        %v231 = vcombine.high %v210, %v210
        %v232 = vcombine.high %v211, %v211
        %v233 = vcombine.high %v212, %v212
        %v234 = vcombine.high %v213, %v213
        %v235 = vcombine.high %v214, %v214
        %v236 = vcombine.high %v215, %v215
        %v237 = vcombine.high %v216, %v216
        %vm238 = vcmask 31744
        %v240 = vsel %vm238, %v207, 0
        %vm242 = vcmask 1043456
        %v243 = vsel %vm242, %v209, 0
        %v245 = vsel %vm242, %v230, 0
        %v247 = vsel %vm242, %v210, 0
        %v249 = vsel %vm242, %v231, 0
        %v251 = vsel %vm242, %v211, 0
        %v253 = vsel %vm242, %v232, 0
        %v255 = vsel %vm242, %v212, 0
        %v257 = vsel %vm242, %v233, 0
        %v259 = vsel %vm242, %v213, 0
        %v261 = vsel %vm242, %v234, 0
        %v263 = vsel %vm242, %v214, 0
        %v265 = vsel %vm242, %v235, 0
        %v267 = vsel %vm242, %v215, 0
        %v269 = vsel %vm242, %v236, 0
        %v271 = vsel %vm242, %v216, 0
        %v273 = vsel %vm242, %v237, 0
        %275 = vmatprep.subr.mxu0 0.0
        %276 = vmatpush1.msra.mxu0 0.0
        %277 = vmatprep.subr.mxu0 0.0
        %278 = vmatpush1.msra.mxu0 0.0
        %279 = vmatprep.subr.mxu0 0.0
        %280 = vmatpush1.msra.mxu0 0.0
        %281 = vmatprep.subr.mxu0 0.0
        %282 = vmatpush1.msra.mxu0 0.0
        %283 = vmatprep.subr.mxu0 0.0
        %284 = vmatpush1.msra.mxu0 0.0
        %285 = vmatprep.subr.mxu0 0.0
        %286 = vmatpush1.msra.mxu0 0.0
        %287 = vmatprep.subr.mxu0 0.0
        %288 = vmatpush1.msra.mxu0 0.0
        %289 = vmatprep.subr.mxu0 0.0
        %290 = vmatpush1.msra.mxu0 0.0
        %291 = vmatprep.subr.mxu0 0.0
        %292 = vmatpush1.msra.mxu0 0.0
        %293 = vmatprep.subr.mxu0 0.0
        %294 = vmatpush1.msra.mxu0 0.0
        %295 = vmatprep.subr.mxu0 0.0
        %296 = vmatpush1.msra.mxu0 0.0
        %297 = vmatprep.subr.mxu0 0.0
        %298 = vmatpush1.msra.mxu0 0.0
        %299 = vmatprep.subr.mxu0 0.0
        %300 = vmatpush1.msra.mxu0 0.0
        %301 = vmatprep.subr.mxu0 0.0
        %302 = vmatpush1.msra.mxu0 0.0
        %303 = vmatprep.subr.mxu0 0.0
        %304 = vmatpush1.msra.mxu0 0.0
        %305 = vmatprep.subr.mxu0 %v245
        %306 = vmatpush1.msra.mxu0 %v243
        %307 = vmatprep.subr.mxu0 0.0
        %308 = vmatpush2.msra.mxu0 0.0
        %309 = vmatprep.subr.mxu0 0.0
        %310 = vmatpush2.msra.mxu0 0.0
        %311 = vmatprep.subr.mxu0 0.0
        %312 = vmatpush2.msra.mxu0 0.0
        %313 = vmatprep.subr.mxu0 0.0
        %314 = vmatpush2.msra.mxu0 0.0
        %315 = vmatprep.subr.mxu0 0.0
        %316 = vmatpush2.msra.mxu0 0.0
        %317 = vmatprep.subr.mxu0 0.0
        %318 = vmatpush2.msra.mxu0 0.0
        %319 = vmatprep.subr.mxu0 0.0
        %320 = vmatpush2.msra.mxu0 0.0
        %321 = vmatprep.subr.mxu0 0.0
        %322 = vmatpush2.msra.mxu0 0.0
        %323 = vmatprep.subr.mxu0 0.0
        %324 = vmatpush2.msra.mxu0 0.0
        %325 = vmatprep.subr.mxu0 0.0
        %326 = vmatpush2.msra.mxu0 0.0
        %327 = vmatprep.subr.mxu0 0.0
        %328 = vmatpush2.msra.mxu0 0.0
        %329 = vmatprep.subr.mxu0 0.0
        %330 = vmatpush2.msra.mxu0 0.0
        %331 = vmatprep.subr.mxu0 0.0
        %332 = vmatpush2.msra.mxu0 0.0
        %333 = vmatprep.subr.mxu0 0.0
        %334 = vmatpush2.msra.mxu0 0.0
        %335 = vmatprep.subr.mxu0 0.0
        %336 = vmatpush2.msra.mxu0 0.0
        %337 = vmatprep.subr.mxu0 0.0
        %338 = vmatpush2.msra.mxu0 0.0
        %339 = vmatprep.mubr.f32.mxu0 0.0
        %340 = vmatmul.mubr.f32.gmra.mxu0 %v240
        %v341 = vpop.f32.mrf.mxu0
        %v342 = vadd.f32 %v220, %v341
        %v343 = vpop.f32.mrf.mxu0
        %v344 = vadd.f32 %v220, %v343
        %345 = vdwg.mxu0
        %346 = vmatprep.subr.mxu0 0.0
        %347 = vmatpush1.msra.mxu0 0.0
        %348 = vmatprep.subr.mxu0 0.0
        %349 = vmatpush1.msra.mxu0 0.0
        %350 = vmatprep.subr.mxu0 0.0
        %351 = vmatpush1.msra.mxu0 0.0
        %352 = vmatprep.subr.mxu0 0.0
        %353 = vmatpush1.msra.mxu0 0.0
        %354 = vmatprep.subr.mxu0 0.0
        %355 = vmatpush1.msra.mxu0 0.0
        %356 = vmatprep.subr.mxu0 0.0
        %357 = vmatpush1.msra.mxu0 0.0
        %358 = vmatprep.subr.mxu0 0.0
        %359 = vmatpush1.msra.mxu0 0.0
        %360 = vmatprep.subr.mxu0 0.0
        %361 = vmatpush1.msra.mxu0 0.0
        %362 = vmatprep.subr.mxu0 0.0
        %363 = vmatpush1.msra.mxu0 0.0
        %364 = vmatprep.subr.mxu0 0.0
        %365 = vmatpush1.msra.mxu0 0.0
        %366 = vmatprep.subr.mxu0 0.0
        %367 = vmatpush1.msra.mxu0 0.0
        %368 = vmatprep.subr.mxu0 0.0
        %369 = vmatpush1.msra.mxu0 0.0
        %370 = vmatprep.subr.mxu0 0.0
        %371 = vmatpush1.msra.mxu0 0.0
        %372 = vmatprep.subr.mxu0 0.0
        %373 = vmatpush1.msra.mxu0 0.0
        %374 = vmatprep.subr.mxu0 0.0
        %375 = vmatpush1.msra.mxu0 0.0
        %376 = vmatprep.subr.mxu0 %v249
        %377 = vmatpush1.msra.mxu0 %v247
        %378 = vmatprep.subr.mxu0 0.0
        %379 = vmatpush2.msra.mxu0 0.0
        %380 = vmatprep.subr.mxu0 0.0
        %381 = vmatpush2.msra.mxu0 0.0
        %382 = vmatprep.subr.mxu0 0.0
        %383 = vmatpush2.msra.mxu0 0.0
        %384 = vmatprep.subr.mxu0 0.0
        %385 = vmatpush2.msra.mxu0 0.0
        %386 = vmatprep.subr.mxu0 0.0
        %387 = vmatpush2.msra.mxu0 0.0
        %388 = vmatprep.subr.mxu0 0.0
        %389 = vmatpush2.msra.mxu0 0.0
        %390 = vmatprep.subr.mxu0 0.0
        %391 = vmatpush2.msra.mxu0 0.0
        %392 = vmatprep.subr.mxu0 0.0
        %393 = vmatpush2.msra.mxu0 0.0
        %394 = vmatprep.subr.mxu0 0.0
        %395 = vmatpush2.msra.mxu0 0.0
        %396 = vmatprep.subr.mxu0 0.0
        %397 = vmatpush2.msra.mxu0 0.0
        %398 = vmatprep.subr.mxu0 0.0
        %399 = vmatpush2.msra.mxu0 0.0
        %400 = vmatprep.subr.mxu0 0.0
        %401 = vmatpush2.msra.mxu0 0.0
        %402 = vmatprep.subr.mxu0 0.0
        %403 = vmatpush2.msra.mxu0 0.0
        %404 = vmatprep.subr.mxu0 0.0
        %405 = vmatpush2.msra.mxu0 0.0
        %406 = vmatprep.subr.mxu0 0.0
        %407 = vmatpush2.msra.mxu0 0.0
        %408 = vmatprep.subr.mxu0 0.0
        %409 = vmatpush2.msra.mxu0 0.0
        %410 = vmatprep.mubr.f32.mxu0 0.0
        %411 = vmatmul.mubr.f32.gmra.mxu0 %v240
        %v412 = vpop.f32.mrf.mxu0
        %v413 = vadd.f32 %v220, %v412
        %v414 = vpop.f32.mrf.mxu0
        %v415 = vadd.f32 %v220, %v414
        %416 = vdwg.mxu0
        %417 = vmatprep.subr.mxu0 0.0
        %418 = vmatpush1.msra.mxu0 0.0
        %419 = vmatprep.subr.mxu0 0.0
        %420 = vmatpush1.msra.mxu0 0.0
        %421 = vmatprep.subr.mxu0 0.0
        %422 = vmatpush1.msra.mxu0 0.0
        %423 = vmatprep.subr.mxu0 0.0
        %424 = vmatpush1.msra.mxu0 0.0
        %425 = vmatprep.subr.mxu0 0.0
        %426 = vmatpush1.msra.mxu0 0.0
        %427 = vmatprep.subr.mxu0 0.0
        %428 = vmatpush1.msra.mxu0 0.0
        %429 = vmatprep.subr.mxu0 0.0
        %430 = vmatpush1.msra.mxu0 0.0
        %431 = vmatprep.subr.mxu0 0.0
        %432 = vmatpush1.msra.mxu0 0.0
        %433 = vmatprep.subr.mxu0 0.0
        %434 = vmatpush1.msra.mxu0 0.0
        %435 = vmatprep.subr.mxu0 0.0
        %436 = vmatpush1.msra.mxu0 0.0
        %437 = vmatprep.subr.mxu0 0.0
        %438 = vmatpush1.msra.mxu0 0.0
        %439 = vmatprep.subr.mxu0 0.0
        %440 = vmatpush1.msra.mxu0 0.0
        %441 = vmatprep.subr.mxu0 0.0
        %442 = vmatpush1.msra.mxu0 0.0
        %443 = vmatprep.subr.mxu0 0.0
        %444 = vmatpush1.msra.mxu0 0.0
        %445 = vmatprep.subr.mxu0 0.0
        %446 = vmatpush1.msra.mxu0 0.0
        %447 = vmatprep.subr.mxu0 %v253
        %448 = vmatpush1.msra.mxu0 %v251
        %449 = vmatprep.subr.mxu0 0.0
        %450 = vmatpush2.msra.mxu0 0.0
        %451 = vmatprep.subr.mxu0 0.0
        %452 = vmatpush2.msra.mxu0 0.0
        %453 = vmatprep.subr.mxu0 0.0
        %454 = vmatpush2.msra.mxu0 0.0
        %455 = vmatprep.subr.mxu0 0.0
        %456 = vmatpush2.msra.mxu0 0.0
        %457 = vmatprep.subr.mxu0 0.0
        %458 = vmatpush2.msra.mxu0 0.0
        %459 = vmatprep.subr.mxu0 0.0
        %460 = vmatpush2.msra.mxu0 0.0
        %461 = vmatprep.subr.mxu0 0.0
        %462 = vmatpush2.msra.mxu0 0.0
        %463 = vmatprep.subr.mxu0 0.0
        %464 = vmatpush2.msra.mxu0 0.0
        %465 = vmatprep.subr.mxu0 0.0
        %466 = vmatpush2.msra.mxu0 0.0
        %467 = vmatprep.subr.mxu0 0.0
        %468 = vmatpush2.msra.mxu0 0.0
        %469 = vmatprep.subr.mxu0 0.0
        %470 = vmatpush2.msra.mxu0 0.0
        %471 = vmatprep.subr.mxu0 0.0
        %472 = vmatpush2.msra.mxu0 0.0
        %473 = vmatprep.subr.mxu0 0.0
        %474 = vmatpush2.msra.mxu0 0.0
        %475 = vmatprep.subr.mxu0 0.0
        %476 = vmatpush2.msra.mxu0 0.0
        %477 = vmatprep.subr.mxu0 0.0
        %478 = vmatpush2.msra.mxu0 0.0
        %479 = vmatprep.subr.mxu0 0.0
        %480 = vmatpush2.msra.mxu0 0.0
        %481 = vmatprep.mubr.f32.mxu0 0.0
        %482 = vmatmul.mubr.f32.gmra.mxu0 %v240
        %v483 = vpop.f32.mrf.mxu0
        %v484 = vadd.f32 %v220, %v483
        %v485 = vpop.f32.mrf.mxu0
        %v486 = vadd.f32 %v220, %v485
        %487 = vdwg.mxu0
        %488 = vmatprep.subr.mxu0 0.0
        %489 = vmatpush1.msra.mxu0 0.0
        %490 = vmatprep.subr.mxu0 0.0
        %491 = vmatpush1.msra.mxu0 0.0
        %492 = vmatprep.subr.mxu0 0.0
        %493 = vmatpush1.msra.mxu0 0.0
        %494 = vmatprep.subr.mxu0 0.0
        %495 = vmatpush1.msra.mxu0 0.0
        %496 = vmatprep.subr.mxu0 0.0
        %497 = vmatpush1.msra.mxu0 0.0
        %498 = vmatprep.subr.mxu0 0.0
        %499 = vmatpush1.msra.mxu0 0.0
        %500 = vmatprep.subr.mxu0 0.0
        %501 = vmatpush1.msra.mxu0 0.0
        %502 = vmatprep.subr.mxu0 0.0
        %503 = vmatpush1.msra.mxu0 0.0
        %504 = vmatprep.subr.mxu0 0.0
        %505 = vmatpush1.msra.mxu0 0.0
        %506 = vmatprep.subr.mxu0 0.0
        %507 = vmatpush1.msra.mxu0 0.0
        %508 = vmatprep.subr.mxu0 0.0
        %509 = vmatpush1.msra.mxu0 0.0
        %510 = vmatprep.subr.mxu0 0.0
        %511 = vmatpush1.msra.mxu0 0.0
        %512 = vmatprep.subr.mxu0 0.0
        %513 = vmatpush1.msra.mxu0 0.0
        %514 = vmatprep.subr.mxu0 0.0
        %515 = vmatpush1.msra.mxu0 0.0
        %516 = vmatprep.subr.mxu0 0.0
        %517 = vmatpush1.msra.mxu0 0.0
        %518 = vmatprep.subr.mxu0 %v257
        %519 = vmatpush1.msra.mxu0 %v255
        %520 = vmatprep.subr.mxu0 0.0
        %521 = vmatpush2.msra.mxu0 0.0
        %522 = vmatprep.subr.mxu0 0.0
        %523 = vmatpush2.msra.mxu0 0.0
        %524 = vmatprep.subr.mxu0 0.0
        %525 = vmatpush2.msra.mxu0 0.0
        %526 = vmatprep.subr.mxu0 0.0
        %527 = vmatpush2.msra.mxu0 0.0
        %528 = vmatprep.subr.mxu0 0.0
        %529 = vmatpush2.msra.mxu0 0.0
        %530 = vmatprep.subr.mxu0 0.0
        %531 = vmatpush2.msra.mxu0 0.0
        %532 = vmatprep.subr.mxu0 0.0
        %533 = vmatpush2.msra.mxu0 0.0
        %534 = vmatprep.subr.mxu0 0.0
        %535 = vmatpush2.msra.mxu0 0.0
        %536 = vmatprep.subr.mxu0 0.0
        %537 = vmatpush2.msra.mxu0 0.0
        %538 = vmatprep.subr.mxu0 0.0
        %539 = vmatpush2.msra.mxu0 0.0
        %540 = vmatprep.subr.mxu0 0.0
        %541 = vmatpush2.msra.mxu0 0.0
        %542 = vmatprep.subr.mxu0 0.0
        %543 = vmatpush2.msra.mxu0 0.0
        %544 = vmatprep.subr.mxu0 0.0
        %545 = vmatpush2.msra.mxu0 0.0
        %546 = vmatprep.subr.mxu0 0.0
        %547 = vmatpush2.msra.mxu0 0.0
        %548 = vmatprep.subr.mxu0 0.0
        %549 = vmatpush2.msra.mxu0 0.0
        %550 = vmatprep.subr.mxu0 0.0
        %551 = vmatpush2.msra.mxu0 0.0
        %552 = vmatprep.mubr.f32.mxu0 0.0
        %553 = vmatmul.mubr.f32.gmra.mxu0 %v240
        %v554 = vpop.f32.mrf.mxu0
        %v555 = vadd.f32 %v220, %v554
        %v556 = vpop.f32.mrf.mxu0
        %v557 = vadd.f32 %v220, %v556
        %558 = vdwg.mxu0
        %559 = vmatprep.subr.mxu0 0.0
        %560 = vmatpush1.msra.mxu0 0.0
        %561 = vmatprep.subr.mxu0 0.0
        %562 = vmatpush1.msra.mxu0 0.0
        %563 = vmatprep.subr.mxu0 0.0
        %564 = vmatpush1.msra.mxu0 0.0
        %565 = vmatprep.subr.mxu0 0.0
        %566 = vmatpush1.msra.mxu0 0.0
        %567 = vmatprep.subr.mxu0 0.0
        %568 = vmatpush1.msra.mxu0 0.0
        %569 = vmatprep.subr.mxu0 0.0
        %570 = vmatpush1.msra.mxu0 0.0
        %571 = vmatprep.subr.mxu0 0.0
        %572 = vmatpush1.msra.mxu0 0.0
        %573 = vmatprep.subr.mxu0 0.0
        %574 = vmatpush1.msra.mxu0 0.0
        %575 = vmatprep.subr.mxu0 0.0
        %576 = vmatpush1.msra.mxu0 0.0
        %577 = vmatprep.subr.mxu0 0.0
        %578 = vmatpush1.msra.mxu0 0.0
        %579 = vmatprep.subr.mxu0 0.0
        %580 = vmatpush1.msra.mxu0 0.0
        %581 = vmatprep.subr.mxu0 0.0
        %582 = vmatpush1.msra.mxu0 0.0
        %583 = vmatprep.subr.mxu0 0.0
        %584 = vmatpush1.msra.mxu0 0.0
        %585 = vmatprep.subr.mxu0 0.0
        %586 = vmatpush1.msra.mxu0 0.0
        %587 = vmatprep.subr.mxu0 0.0
        %588 = vmatpush1.msra.mxu0 0.0
        %589 = vmatprep.subr.mxu0 %v261
        %590 = vmatpush1.msra.mxu0 %v259
        %591 = vmatprep.subr.mxu0 0.0
        %592 = vmatpush2.msra.mxu0 0.0
        %593 = vmatprep.subr.mxu0 0.0
        %594 = vmatpush2.msra.mxu0 0.0
        %595 = vmatprep.subr.mxu0 0.0
        %596 = vmatpush2.msra.mxu0 0.0
        %597 = vmatprep.subr.mxu0 0.0
        %598 = vmatpush2.msra.mxu0 0.0
        %599 = vmatprep.subr.mxu0 0.0
        %600 = vmatpush2.msra.mxu0 0.0
        %601 = vmatprep.subr.mxu0 0.0
        %602 = vmatpush2.msra.mxu0 0.0
        %603 = vmatprep.subr.mxu0 0.0
        %604 = vmatpush2.msra.mxu0 0.0
        %605 = vmatprep.subr.mxu0 0.0
        %606 = vmatpush2.msra.mxu0 0.0
        %607 = vmatprep.subr.mxu0 0.0
        %608 = vmatpush2.msra.mxu0 0.0
        %609 = vmatprep.subr.mxu0 0.0
        %610 = vmatpush2.msra.mxu0 0.0
        %611 = vmatprep.subr.mxu0 0.0
        %612 = vmatpush2.msra.mxu0 0.0
        %613 = vmatprep.subr.mxu0 0.0
        %614 = vmatpush2.msra.mxu0 0.0
        %615 = vmatprep.subr.mxu0 0.0
        %616 = vmatpush2.msra.mxu0 0.0
        %617 = vmatprep.subr.mxu0 0.0
        %618 = vmatpush2.msra.mxu0 0.0
        %619 = vmatprep.subr.mxu0 0.0
        %620 = vmatpush2.msra.mxu0 0.0
        %621 = vmatprep.subr.mxu0 0.0
        %622 = vmatpush2.msra.mxu0 0.0
        %623 = vmatprep.mubr.f32.mxu0 0.0
        %624 = vmatmul.mubr.f32.gmra.mxu0 %v240
        %v625 = vpop.f32.mrf.mxu0
        %v626 = vadd.f32 %v220, %v625
        %v627 = vpop.f32.mrf.mxu0
        %v628 = vadd.f32 %v220, %v627
        %629 = vdwg.mxu0
        %630 = vmatprep.subr.mxu0 0.0
        %631 = vmatpush1.msra.mxu0 0.0
        %632 = vmatprep.subr.mxu0 0.0
        %633 = vmatpush1.msra.mxu0 0.0
        %634 = vmatprep.subr.mxu0 0.0
        %635 = vmatpush1.msra.mxu0 0.0
        %636 = vmatprep.subr.mxu0 0.0
        %637 = vmatpush1.msra.mxu0 0.0
        %638 = vmatprep.subr.mxu0 0.0
        %639 = vmatpush1.msra.mxu0 0.0
        %640 = vmatprep.subr.mxu0 0.0
        %641 = vmatpush1.msra.mxu0 0.0
        %642 = vmatprep.subr.mxu0 0.0
        %643 = vmatpush1.msra.mxu0 0.0
        %644 = vmatprep.subr.mxu0 0.0
        %645 = vmatpush1.msra.mxu0 0.0
        %646 = vmatprep.subr.mxu0 0.0
        %647 = vmatpush1.msra.mxu0 0.0
        %648 = vmatprep.subr.mxu0 0.0
        %649 = vmatpush1.msra.mxu0 0.0
        %650 = vmatprep.subr.mxu0 0.0
        %651 = vmatpush1.msra.mxu0 0.0
        %652 = vmatprep.subr.mxu0 0.0
        %653 = vmatpush1.msra.mxu0 0.0
        %654 = vmatprep.subr.mxu0 0.0
        %655 = vmatpush1.msra.mxu0 0.0
        %656 = vmatprep.subr.mxu0 0.0
        %657 = vmatpush1.msra.mxu0 0.0
        %658 = vmatprep.subr.mxu0 0.0
        %659 = vmatpush1.msra.mxu0 0.0
        %660 = vmatprep.subr.mxu0 %v265
        %661 = vmatpush1.msra.mxu0 %v263
        %662 = vmatprep.subr.mxu0 0.0
        %663 = vmatpush2.msra.mxu0 0.0
        %664 = vmatprep.subr.mxu0 0.0
        %665 = vmatpush2.msra.mxu0 0.0
        %666 = vmatprep.subr.mxu0 0.0
        %667 = vmatpush2.msra.mxu0 0.0
        %668 = vmatprep.subr.mxu0 0.0
        %669 = vmatpush2.msra.mxu0 0.0
        %670 = vmatprep.subr.mxu0 0.0
        %671 = vmatpush2.msra.mxu0 0.0
        %672 = vmatprep.subr.mxu0 0.0
        %673 = vmatpush2.msra.mxu0 0.0
        %674 = vmatprep.subr.mxu0 0.0
        %675 = vmatpush2.msra.mxu0 0.0
        %676 = vmatprep.subr.mxu0 0.0
        %677 = vmatpush2.msra.mxu0 0.0
        %678 = vmatprep.subr.mxu0 0.0
        %679 = vmatpush2.msra.mxu0 0.0
        %680 = vmatprep.subr.mxu0 0.0
        %681 = vmatpush2.msra.mxu0 0.0
        %682 = vmatprep.subr.mxu0 0.0
        %683 = vmatpush2.msra.mxu0 0.0
        %684 = vmatprep.subr.mxu0 0.0
        %685 = vmatpush2.msra.mxu0 0.0
        %686 = vmatprep.subr.mxu0 0.0
        %687 = vmatpush2.msra.mxu0 0.0
        %688 = vmatprep.subr.mxu0 0.0
        %689 = vmatpush2.msra.mxu0 0.0
        %690 = vmatprep.subr.mxu0 0.0
        %691 = vmatpush2.msra.mxu0 0.0
        %692 = vmatprep.subr.mxu0 0.0
        %693 = vmatpush2.msra.mxu0 0.0
        %694 = vmatprep.mubr.f32.mxu0 0.0
        %695 = vmatmul.mubr.f32.gmra.mxu0 %v240
        %v696 = vpop.f32.mrf.mxu0
        %v697 = vadd.f32 %v220, %v696
        %v698 = vpop.f32.mrf.mxu0
        %v699 = vadd.f32 %v220, %v698
        %700 = vdwg.mxu0
        %701 = vmatprep.subr.mxu0 0.0
        %702 = vmatpush1.msra.mxu0 0.0
        %703 = vmatprep.subr.mxu0 0.0
        %704 = vmatpush1.msra.mxu0 0.0
        %705 = vmatprep.subr.mxu0 0.0
        %706 = vmatpush1.msra.mxu0 0.0
        %707 = vmatprep.subr.mxu0 0.0
        %708 = vmatpush1.msra.mxu0 0.0
        %709 = vmatprep.subr.mxu0 0.0
        %710 = vmatpush1.msra.mxu0 0.0
        %711 = vmatprep.subr.mxu0 0.0
        %712 = vmatpush1.msra.mxu0 0.0
        %713 = vmatprep.subr.mxu0 0.0
        %714 = vmatpush1.msra.mxu0 0.0
        %715 = vmatprep.subr.mxu0 0.0
        %716 = vmatpush1.msra.mxu0 0.0
        %717 = vmatprep.subr.mxu0 0.0
        %718 = vmatpush1.msra.mxu0 0.0
        %719 = vmatprep.subr.mxu0 0.0
        %720 = vmatpush1.msra.mxu0 0.0
        %721 = vmatprep.subr.mxu0 0.0
        %722 = vmatpush1.msra.mxu0 0.0
        %723 = vmatprep.subr.mxu0 0.0
        %724 = vmatpush1.msra.mxu0 0.0
        %725 = vmatprep.subr.mxu0 0.0
        %726 = vmatpush1.msra.mxu0 0.0
        %727 = vmatprep.subr.mxu0 0.0
        %728 = vmatpush1.msra.mxu0 0.0
        %729 = vmatprep.subr.mxu0 0.0
        %730 = vmatpush1.msra.mxu0 0.0
        %731 = vmatprep.subr.mxu0 %v269
        %732 = vmatpush1.msra.mxu0 %v267
        %733 = vmatprep.subr.mxu0 0.0
        %734 = vmatpush2.msra.mxu0 0.0
        %735 = vmatprep.subr.mxu0 0.0
        %736 = vmatpush2.msra.mxu0 0.0
        %737 = vmatprep.subr.mxu0 0.0
        %738 = vmatpush2.msra.mxu0 0.0
        %739 = vmatprep.subr.mxu0 0.0
        %740 = vmatpush2.msra.mxu0 0.0
        %741 = vmatprep.subr.mxu0 0.0
        %742 = vmatpush2.msra.mxu0 0.0
        %743 = vmatprep.subr.mxu0 0.0
        %744 = vmatpush2.msra.mxu0 0.0
        %745 = vmatprep.subr.mxu0 0.0
        %746 = vmatpush2.msra.mxu0 0.0
        %747 = vmatprep.subr.mxu0 0.0
        %748 = vmatpush2.msra.mxu0 0.0
        %749 = vmatprep.subr.mxu0 0.0
        %750 = vmatpush2.msra.mxu0 0.0
        %751 = vmatprep.subr.mxu0 0.0
        %752 = vmatpush2.msra.mxu0 0.0
        %753 = vmatprep.subr.mxu0 0.0
        %754 = vmatpush2.msra.mxu0 0.0
        %755 = vmatprep.subr.mxu0 0.0
        %756 = vmatpush2.msra.mxu0 0.0
        %757 = vmatprep.subr.mxu0 0.0
        %758 = vmatpush2.msra.mxu0 0.0
        %759 = vmatprep.subr.mxu0 0.0
        %760 = vmatpush2.msra.mxu0 0.0
        %761 = vmatprep.subr.mxu0 0.0
        %762 = vmatpush2.msra.mxu0 0.0
        %763 = vmatprep.subr.mxu0 0.0
        %764 = vmatpush2.msra.mxu0 0.0
        %765 = vmatprep.mubr.f32.mxu0 0.0
        %766 = vmatmul.mubr.f32.gmra.mxu0 %v240
        %v767 = vpop.f32.mrf.mxu0
        %v768 = vadd.f32 %v220, %v767
        %v769 = vpop.f32.mrf.mxu0
        %v770 = vadd.f32 %v220, %v769
        %771 = vdwg.mxu0
        %772 = vmatprep.subr.mxu0 0.0
        %773 = vmatpush1.msra.mxu0 0.0
        %774 = vmatprep.subr.mxu0 0.0
        %775 = vmatpush1.msra.mxu0 0.0
        %776 = vmatprep.subr.mxu0 0.0
        %777 = vmatpush1.msra.mxu0 0.0
        %778 = vmatprep.subr.mxu0 0.0
        %779 = vmatpush1.msra.mxu0 0.0
        %780 = vmatprep.subr.mxu0 0.0
        %781 = vmatpush1.msra.mxu0 0.0
        %782 = vmatprep.subr.mxu0 0.0
        %783 = vmatpush1.msra.mxu0 0.0
        %784 = vmatprep.subr.mxu0 0.0
        %785 = vmatpush1.msra.mxu0 0.0
        %786 = vmatprep.subr.mxu0 0.0
        %787 = vmatpush1.msra.mxu0 0.0
        %788 = vmatprep.subr.mxu0 0.0
        %789 = vmatpush1.msra.mxu0 0.0
        %790 = vmatprep.subr.mxu0 0.0
        %791 = vmatpush1.msra.mxu0 0.0
        %792 = vmatprep.subr.mxu0 0.0
        %793 = vmatpush1.msra.mxu0 0.0
        %794 = vmatprep.subr.mxu0 0.0
        %795 = vmatpush1.msra.mxu0 0.0
        %796 = vmatprep.subr.mxu0 0.0
        %797 = vmatpush1.msra.mxu0 0.0
        %798 = vmatprep.subr.mxu0 0.0
        %799 = vmatpush1.msra.mxu0 0.0
        %800 = vmatprep.subr.mxu0 0.0
        %801 = vmatpush1.msra.mxu0 0.0
        %802 = vmatprep.subr.mxu0 %v273
        %803 = vmatpush1.msra.mxu0 %v271
        %804 = vmatprep.subr.mxu0 0.0
        %805 = vmatpush2.msra.mxu0 0.0
        %806 = vmatprep.subr.mxu0 0.0
        %807 = vmatpush2.msra.mxu0 0.0
        %808 = vmatprep.subr.mxu0 0.0
        %809 = vmatpush2.msra.mxu0 0.0
        %810 = vmatprep.subr.mxu0 0.0
        %811 = vmatpush2.msra.mxu0 0.0
        %812 = vmatprep.subr.mxu0 0.0
        %813 = vmatpush2.msra.mxu0 0.0
        %814 = vmatprep.subr.mxu0 0.0
        %815 = vmatpush2.msra.mxu0 0.0
        %816 = vmatprep.subr.mxu0 0.0
        %817 = vmatpush2.msra.mxu0 0.0
        %818 = vmatprep.subr.mxu0 0.0
        %819 = vmatpush2.msra.mxu0 0.0
        %820 = vmatprep.subr.mxu0 0.0
        %821 = vmatpush2.msra.mxu0 0.0
        %822 = vmatprep.subr.mxu0 0.0
        %823 = vmatpush2.msra.mxu0 0.0
        %824 = vmatprep.subr.mxu0 0.0
        %825 = vmatpush2.msra.mxu0 0.0
        %826 = vmatprep.subr.mxu0 0.0
        %827 = vmatpush2.msra.mxu0 0.0
        %828 = vmatprep.subr.mxu0 0.0
        %829 = vmatpush2.msra.mxu0 0.0
        %830 = vmatprep.subr.mxu0 0.0
        %831 = vmatpush2.msra.mxu0 0.0
        %832 = vmatprep.subr.mxu0 0.0
        %833 = vmatpush2.msra.mxu0 0.0
        %834 = vmatprep.subr.mxu0 0.0
        %835 = vmatpush2.msra.mxu0 0.0
        %836 = vmatprep.mubr.f32.mxu0 0.0
        %837 = vmatmul.mubr.f32.gmra.mxu0 %v240
        %v838 = vpop.f32.mrf.mxu0
        %v839 = vadd.f32 %v220, %v838
        %v840 = vpop.f32.mrf.mxu0
        %v841 = vadd.f32 %v220, %v840
        %842 = vdwg.mxu0
        %v859 = vcombine.low %v342, %v344
        %v860 = vcombine.low %v413, %v415
        %v861 = vcombine.low %v484, %v486
        %v862 = vcombine.low %v555, %v557
        %v863 = vcombine.low %v626, %v628
        %v864 = vcombine.low %v697, %v699
        %v865 = vcombine.low %v768, %v770
        %v866 = vcombine.low %v839, %v841
        %875 = vst [vmem:[%s204] sm:$0xff] %v859
        %876 = vst [vmem:[%s204 + $0x8] sm:$0xff] %v860
        %877 = vst [vmem:[%s204 + $0x10] sm:$0xff] %v861
        %878 = vst [vmem:[%s204 + $0x18] sm:$0xff] %v862
        %879 = vst [vmem:[%s204 + $0x20] sm:$0xff] %v863
        %880 = vst [vmem:[%s204 + $0x28] sm:$0xff] %v864
        %881 = vst [vmem:[%s204 + $0x30] sm:$0xff] %v865
        %882 = vst [vmem:[%s204 + $0x38] sm:$0xff] %v866
        %s883 = sand.u32 %s112, 1
        %s884 = scalar_lea.sflag [#allocation4], %s883
        %s885 = sand.u32 %s112, 1
        %s886 = smul.addr %s885, 64
        %s887 = scalar_lea.vmem [#allocation5], %s886
        // Predicated region
        $region37: #{tpu_custom_call.1} parent=31 // pred_check
          %p888 = pneg %p122
        $region38: #{tpu_custom_call.1} parent=31 // pred_check_branch
          %890 = sbr.rel (%p888) target = $region40
        $region39: #{tpu_custom_call.1} parent=31 // pred_region
          %s891 = smul.u32 16, %s25
          %s893 = ssub.s32 1024, 1024
          %894 = vsyncadd %s884, %s893
          %s895 = smul.addr %s24, 16
          %s896 = sadd.s32 %s891, %s895
          %s897 = smul.addr %s896, 64
          %s898 = scalar_lea.hbm %s3, %s897
          %s900 = sshll.u32 %s887, 4
          %s901 = int_to_ptr.vmem [resolvable:$true] %s900
          %903 = dma.vmem_to_hbm [thread:$0]  %s901, 1024, %s898, %s884
        $region40: #{tpu_custom_call.1} parent=31 // pred_fallthru
          _
      $region32: #{tpu_custom_call.1} parent=5 // pred_fallthru
        _
      %p904 = scmp.le.s32.totalorder 2, %s15
      // Predicated region
      $region41: #{tpu_custom_call.1} parent=5 // pred_check
        %p905 = pneg %p904
      $region42: #{tpu_custom_call.1} parent=5 // pred_check_branch
        %907 = sbr.rel (%p905) target = $region44
      $region43: #{tpu_custom_call.1} parent=5 // pred_region
        %s908 = ssub.s32 %s15, 2
        // Predicated region
        $region45: #{tpu_custom_call.1} parent=43 // pred_check
          %p909 = pneg %p128
        $region46: #{tpu_custom_call.1} parent=43 // pred_check_branch
          %911 = sbr.rel (%p909) target = $region48
        $region47: #{tpu_custom_call.1} parent=43 // pred_region
          %s912 = sand.u32 %s113, 1
          %s913 = scalar_lea.sflag [#allocation4], %s912
          %s914 = sand.u32 %s113, 1
          %s915 = smul.addr %s914, 64
          %s916 = scalar_lea.vmem [#allocation5], %s915
          %917 = dma.done %s913, 1024
        $region48: #{tpu_custom_call.1} parent=43 // pred_fallthru
          _
      $region44: #{tpu_custom_call.1} parent=5 // pred_fallthru
        _
    $region6: #{tpu_custom_call.1} parent=1 // loop_footer
      %s19 = sadd.s32 1, %s15
    $region7: #{tpu_custom_call.1} parent=1 // loop_footer_branch
      %14 = sbr.rel target = $region3
    $region8: #{tpu_custom_call.1} parent=1 // loop_exit
      _
    %918 = vsyncpa [#allocation3], 1
    %s919 = scalar_lea.sflag [#allocation3], 1
    %920 = vsyncpa %s919, 1
    %921 = vsyncpa [#allocation4], 1
    %s922 = scalar_lea.sflag [#allocation4], 1
    %923 = vsyncpa %s922, 1

</llo_original>
